<compile_context>
chip_gen: v6e
topology: v6e:2x2x1
jax: 0.10.0
libtpu: 0.0.40
codegen_flags: <defaults>
</compile_context>

<pallas_src>
import jax
import jax.numpy as jnp
from jax.experimental import pallas as pl
from jax.experimental.pallas import tpu as pltpu

LANE = 128  # TPU lane width


def _round_up(n, m):
    return ((n + m - 1) // m) * m


def mlp_kernel(x_ref, w1_ref, b1_ref, w2_ref, b2_ref, o_ref):
    # x arrives f32; pack to bf16 only at the MXU boundary.
    x = x_ref[...].astype(jnp.bfloat16)
    h = jnp.dot(x, w1_ref[...], preferred_element_type=jnp.float32)
    # Bias + ReLU in f32 on the VPU.
    h = jnp.maximum(h + b1_ref[...], 0.0)
    out = jnp.dot(h.astype(w2_ref.dtype), w2_ref[...],
                  preferred_element_type=jnp.float32)
    # Lane-dense (padded-to-128) store; real columns sliced in the wrapper.
    o_ref[...] = (out + b2_ref[...]).astype(o_ref.dtype)


def preprocess_params(w1, b1, w2, b2):
    """One-time (per parameter update) weight cast/pad, hoisted out of forward.

    Layout: weights are (in, out), i.e. transposed vs. PyTorch nn.Linear, so
    the kernel computes y = x @ W + b.
    """
    obs, H = w1.shape
    A = w2.shape[1]
    A_pad = _round_up(A, LANE)
    w1_b = w1.astype(jnp.bfloat16)
    b1_p = jnp.reshape(b1, (1, H)).astype(jnp.float32)
    w2_p = jnp.pad(w2, ((0, 0), (0, A_pad - A))).astype(jnp.bfloat16)
    b2_p = jnp.pad(jnp.reshape(b2, (1, A)), ((0, 0), (0, A_pad - A))).astype(jnp.float32)
    return (w1_b, b1_p, w2_p, b2_p, A)


def net_forward(x, prep, *, block_b=None, out_dtype=jnp.float32):
    """x: (B, obs_size) f32; returns (B, n_actions) out_dtype."""
    w1_b, b1_p, w2_p, b2_p, A = prep
    B, obs = x.shape
    H = w1_b.shape[1]
    A_pad = w2_p.shape[1]

    if block_b is None:
        # Single grid step for small batches; 512-row tiles for larger ones.
        block_b = _round_up(B, 8) if B <= 1024 else 512

    B_pad = _round_up(B, block_b)
    x_p = x if B_pad == B else jnp.pad(x, ((0, B_pad - B), (0, 0)))

    grid = (B_pad // block_b,)

    out = pl.pallas_call(
        mlp_kernel,
        out_shape=jax.ShapeDtypeStruct((B_pad, A_pad), out_dtype),
        grid_spec=pltpu.PrefetchScalarGridSpec(
            num_scalar_prefetch=0,
            grid=grid,
            in_specs=[
                # Batch-tiled activations (auto double-buffered by BlockSpec).
                pl.BlockSpec((block_b, obs), lambda i: (i, 0)),
                # Weights / biases: constant index_map -> VMEM-resident.
                pl.BlockSpec((obs, H), lambda i: (0, 0)),
                pl.BlockSpec((1, H), lambda i: (0, 0)),
                pl.BlockSpec((H, A_pad), lambda i: (0, 0)),
                pl.BlockSpec((1, A_pad), lambda i: (0, 0)),
            ],
            out_specs=pl.BlockSpec((block_b, A_pad), lambda i: (i, 0)),
        ),
        compiler_params=pltpu.CompilerParams(
            dimension_semantics=("parallel",)),
    )(x_p, w1_b, b1_p, w2_p, b2_p)

    return out[:B, :A]


def onehot_q_table(w1, b1, w2, b2):
    """FrozenLake fast path: for one-hot inputs the whole net is a table.

    Recompute once per parameter update; the forward pass is then just
    jnp.take(table, state, axis=0) — no matmul kernel needed.
    """
    return jnp.maximum(w1 + jnp.reshape(b1, (1, -1)), 0.0) @ w2 + jnp.reshape(b2, (1, -1))


def init_params(key, obs_size, hidden_size, n_actions):
    """Deterministic PyTorch-Linear-style init (uniform +-1/sqrt(fan_in))."""
    k1, k2, k3, k4 = jax.random.split(key, 4)
    lim1 = 1.0 / jnp.sqrt(jnp.float32(obs_size))
    lim2 = 1.0 / jnp.sqrt(jnp.float32(hidden_size))
    w1 = jax.random.uniform(k1, (obs_size, hidden_size), jnp.float32, -lim1, lim1)
    b1 = jax.random.uniform(k2, (hidden_size,), jnp.float32, -lim1, lim1)
    w2 = jax.random.uniform(k3, (hidden_size, n_actions), jnp.float32, -lim2, lim2)
    b2 = jax.random.uniform(k4, (n_actions,), jnp.float32, -lim2, lim2)
    return w1, b1, w2, b2


if __name__ == "__main__":
    # FrozenLake-v1: 16 discrete states one-hot encoded -> obs_size=16,
    # 4 actions -> n_actions=4. hidden_size=128 (canonical, lane-aligned).
    obs_size, hidden_size, n_actions = 16, 128, 4
    batch = 256  # small batch -> single grid step

    key = jax.random.PRNGKey(0)
    kx, kp = jax.random.split(key)

    # One-hot observations (like DiscreteOneHotWrapper output), batched.
    states = jax.random.randint(kx, (batch,), 0, obs_size)
    x = jax.nn.one_hot(states, obs_size, dtype=jnp.float32)

    w1, b1, w2, b2 = init_params(kp, obs_size, hidden_size, n_actions)

    # Hoisted, once-per-parameter-update preprocessing.
    prep = preprocess_params(w1, b1, w2, b2)

    out = net_forward(x, prep)
    jax.block_until_ready(out)

    # Reference check in plain JAX (f32). Kernel uses bf16 MXU inputs with
    # f32 accumulation, so allow a small tolerance.
    ref = jnp.maximum(x @ w1 + b1.reshape(1, -1), 0.0) @ w2 + b2.reshape(1, -1)
    assert out.shape == (batch, n_actions)
    assert jnp.allclose(out, ref, atol=1e-2, rtol=1e-2), (
        float(jnp.max(jnp.abs(out - ref))))

    # One-hot fast path (the real FrozenLake workload): table gather == ref.
    table = onehot_q_table(w1, b1, w2, b2)
    fast = jnp.take(table, states, axis=0)
    jax.block_until_ready(fast)
    assert jnp.allclose(fast, ref, atol=1e-5, rtol=1e-5)

    print("KERNEL_OK")
</pallas_src>

<mosaic_0001>
module attributes {stable_mosaic.version = 11 : i64} {
  func.func @mlp_kernel(%arg0: i32, %arg1: memref<256x16xf32, #tpu.memory_space<vmem>>, %arg2: memref<16x128xbf16, #tpu.memory_space<vmem>>, %arg3: memref<1x128xf32, #tpu.memory_space<vmem>>, %arg4: memref<128x128xbf16, #tpu.memory_space<vmem>>, %arg5: memref<1x128xf32, #tpu.memory_space<vmem>>, %arg6: memref<256x128xf32, #tpu.memory_space<vmem>>) attributes {dimension_semantics = [#tpu.dimension_semantics<parallel>], iteration_bounds = array<i64: 1>, scalar_prefetch = 0 : i64, scratch_operands = 0 : i64, tpu.core_type = #tpu.core_type<tc>, window_params = [{transform_indices = @transform_0, window_bounds = array<i64: 256, 16>}, {pipeline_mode = #tpu.pipeline_mode<synchronous>, transform_indices = @transform_1, window_bounds = array<i64: 16, 128>}, {pipeline_mode = #tpu.pipeline_mode<synchronous>, transform_indices = @transform_2, window_bounds = array<i64: 1, 128>}, {pipeline_mode = #tpu.pipeline_mode<synchronous>, transform_indices = @transform_3, window_bounds = array<i64: 128, 128>}, {pipeline_mode = #tpu.pipeline_mode<synchronous>, transform_indices = @transform_4, window_bounds = array<i64: 1, 128>}, {transform_indices = @transform_5, window_bounds = array<i64: 256, 128>}]} {
    %c0 = arith.constant 0 : index
    %c0_0 = arith.constant 0 : index
    %0 = vector.load %arg1[%c0, %c0_0] : memref<256x16xf32, #tpu.memory_space<vmem>>, vector<256x16xf32>
    %1 = arith.truncf %0 : vector<256x16xf32> to vector<256x16xbf16>
    %c0_1 = arith.constant 0 : index
    %c0_2 = arith.constant 0 : index
    %2 = vector.load %arg2[%c0_1, %c0_2] : memref<16x128xbf16, #tpu.memory_space<vmem>>, vector<16x128xbf16>
    %cst = arith.constant dense<0.000000e+00> : vector<256x128xf32>
    %3 = tpu.matmul %1, %2, %cst {dimension_numbers = #tpu.dot_dimension_numbers<[1], [0], [0], [1], [0, 0, 1, 1], [], []>} : vector<256x16xbf16>, vector<16x128xbf16>, vector<256x128xf32> -> vector<256x128xf32>
    %c0_3 = arith.constant 0 : index
    %c0_4 = arith.constant 0 : index
    %4 = vector.load %arg3[%c0_3, %c0_4] : memref<1x128xf32, #tpu.memory_space<vmem>>, vector<1x128xf32>
    %5 = vector.broadcast %4 : vector<1x128xf32> to vector<256x128xf32>
    %6 = arith.addf %3, %5 : vector<256x128xf32>
    %cst_5 = arith.constant 0.000000e+00 : f32
    %7 = vector.broadcast %cst_5 : f32 to vector<256x128xf32>
    %8 = arith.maximumf %6, %7 : vector<256x128xf32>
    %9 = arith.truncf %8 : vector<256x128xf32> to vector<256x128xbf16>
    %c0_6 = arith.constant 0 : index
    %c0_7 = arith.constant 0 : index
    %10 = vector.load %arg4[%c0_6, %c0_7] : memref<128x128xbf16, #tpu.memory_space<vmem>>, vector<128x128xbf16>
    %cst_8 = arith.constant dense<0.000000e+00> : vector<256x128xf32>
    %11 = tpu.matmul %9, %10, %cst_8 {dimension_numbers = #tpu.dot_dimension_numbers<[1], [0], [0], [1], [0, 0, 1, 1], [], []>} : vector<256x128xbf16>, vector<128x128xbf16>, vector<256x128xf32> -> vector<256x128xf32>
    %c0_9 = arith.constant 0 : index
    %c0_10 = arith.constant 0 : index
    %12 = vector.load %arg5[%c0_9, %c0_10] : memref<1x128xf32, #tpu.memory_space<vmem>>, vector<1x128xf32>
    %13 = vector.broadcast %12 : vector<1x128xf32> to vector<256x128xf32>
    %14 = arith.addf %11, %13 : vector<256x128xf32>
    %c0_11 = arith.constant 0 : index
    %c0_12 = arith.constant 0 : index
    %15 = vector.load %arg6[%c0_11, %c0_12] : memref<256x128xf32, #tpu.memory_space<vmem>>, vector<256x128xf32>
    tpu.vector_store %arg6[%c0_11, %c0_12], %14 {strides = array<i32>} : memref<256x128xf32, #tpu.memory_space<vmem>>, vector<256x128xf32>,
    return
  }
  func.func @transform_0(%arg0: i32) -> (i32, i32) {
    %c0_i32 = arith.constant 0 : i32
    %c0_i32_0 = arith.constant 0 : i32
    return %arg0, %c0_i32 : i32, i32
  }
  func.func @transform_1(%arg0: i32) -> (i32, i32) {
    %c0_i32 = arith.constant 0 : i32
    %c0_i32_0 = arith.constant 0 : i32
    %c0_i32_1 = arith.constant 0 : i32
    return %c0_i32, %c0_i32_0 : i32, i32
  }
  func.func @transform_2(%arg0: i32) -> (i32, i32) {
    %c0_i32 = arith.constant 0 : i32
    %c0_i32_0 = arith.constant 0 : i32
    %c0_i32_1 = arith.constant 0 : i32
    return %c0_i32, %c0_i32_0 : i32, i32
  }
  func.func @transform_3(%arg0: i32) -> (i32, i32) {
    %c0_i32 = arith.constant 0 : i32
    %c0_i32_0 = arith.constant 0 : i32
    %c0_i32_1 = arith.constant 0 : i32
    return %c0_i32, %c0_i32_0 : i32, i32
  }
  func.func @transform_4(%arg0: i32) -> (i32, i32) {
    %c0_i32 = arith.constant 0 : i32
    %c0_i32_0 = arith.constant 0 : i32
    %c0_i32_1 = arith.constant 0 : i32
    return %c0_i32, %c0_i32_0 : i32, i32
  }
  func.func @transform_5(%arg0: i32) -> (i32, i32) {
    %c0_i32 = arith.constant 0 : i32
    %c0_i32_0 = arith.constant 0 : i32
    return %arg0, %c0_i32 : i32, i32
  }
}

</mosaic_0001>

<llo_original>
// kernel: tpu_custom_call.1
$region0: #{tpu_custom_call.1}
  #allocation0 [shape = 'u32[]', space=smem, size = 0x4, offset = 0x4, fixed_abs, tag = 'smem constant byte address 0x4 - core index']
  #allocation1 [shape = 'u32[144,128]{1,0:T(1,128)}', space=vmem, size = 0x12000, scoped, tag = 'internal scratch']
  %s0 = inlined_call_operand.vmem [shape: f32[256,16], index: 0, kind: input, shape index: {}]
  %s1 = inlined_call_operand.vmem [shape: bf16[16,128], index: 1, kind: input, shape index: {}]
  %s2 = inlined_call_operand.vmem [shape: f32[1,128], index: 2, kind: input, shape index: {}]
  %s3 = inlined_call_operand.vmem [shape: bf16[128,128], index: 3, kind: input, shape index: {}]
  %s4 = inlined_call_operand.vmem [shape: f32[1,128], index: 4, kind: input, shape index: {}]
  %s5 = inlined_call_operand.hbm [shape: f32[256,128], index: 5, kind: output, shape index: {}]
  %s6 = sld [smem:[#allocation0]]
  $region30: #{tpu_custom_call.1} parent=0
    _
  %s8 = ssub.s32 1, %s6
  %s9 = scalar_select 0, %s8, %s6
  $region1: #{tpu_custom_call.1} parent=0
    #allocation2 [shape = 'u8[131072]{0}', space=vmem, size = 0x20000, scoped, tag = 'output window, operand 0, single buffered']
    #allocation3 [shape = 's32[1]{0}', space=sflag, size = 0x4, scoped, tag = 'scoped memory for tpu_custom_call.1']
    %10 = vsyncpa [#allocation3], 0
    // Predicated region
    $region2: #{tpu_custom_call.1} parent=1 // pred_check
      _
    $region3: #{tpu_custom_call.1} parent=1 // pred_check_branch
      %12 = sbr.rel (0) target = $region5
    $region4: #{tpu_custom_call.1} parent=1 // pred_region
      _
    $region5: #{tpu_custom_call.1} parent=1 // pred_fallthru
      _
    // Predicated region
    $region6: #{tpu_custom_call.1} parent=1 // pred_check
      _
    $region7: #{tpu_custom_call.1} parent=1 // pred_check_branch
      %14 = sbr.rel (0) target = $region9
    $region8: #{tpu_custom_call.1} parent=1 // pred_region
      _
    $region9: #{tpu_custom_call.1} parent=1 // pred_fallthru
      _
    // Predicated region
    $region10: #{tpu_custom_call.1} parent=1 // pred_check
      _
    $region11: #{tpu_custom_call.1} parent=1 // pred_check_branch
      %16 = sbr.rel (0) target = $region13
    $region12: #{tpu_custom_call.1} parent=1 // pred_region
      _
    $region13: #{tpu_custom_call.1} parent=1 // pred_fallthru
      _
    // Predicated region
    $region14: #{tpu_custom_call.1} parent=1 // pred_check
      _
    $region15: #{tpu_custom_call.1} parent=1 // pred_check_branch
      %18 = sbr.rel (0) target = $region17
    $region16: #{tpu_custom_call.1} parent=1 // pred_region
      _
    $region17: #{tpu_custom_call.1} parent=1 // pred_fallthru
      _
    // Predicated region
    $region18: #{tpu_custom_call.1} parent=1 // pred_check
      _
    $region19: #{tpu_custom_call.1} parent=1 // pred_check_branch
      %20 = sbr.rel (0) target = $region21
    $region20: #{tpu_custom_call.1} parent=1 // pred_region
      _
    $region21: #{tpu_custom_call.1} parent=1 // pred_fallthru
      _
    %v22 = vld [vmem:[%s0] sm:$0xff]
    %v23 = vld [vmem:[%s0 + $0x8] sm:$0xff]
    %v24 = vld [vmem:[%s0 + $0x10] sm:$0xff]
    %v25 = vld [vmem:[%s0 + $0x18] sm:$0xff]
    %v26 = vld [vmem:[%s0 + $0x20] sm:$0xff]
    %v27 = vld [vmem:[%s0 + $0x28] sm:$0xff]
    %v28 = vld [vmem:[%s0 + $0x30] sm:$0xff]
    %v29 = vld [vmem:[%s0 + $0x38] sm:$0xff]
    %v30 = vld [vmem:[%s0 + $0x40] sm:$0xff]
    %v31 = vld [vmem:[%s0 + $0x48] sm:$0xff]
    %v32 = vld [vmem:[%s0 + $0x50] sm:$0xff]
    %v33 = vld [vmem:[%s0 + $0x58] sm:$0xff]
    %v34 = vld [vmem:[%s0 + $0x60] sm:$0xff]
    %v35 = vld [vmem:[%s0 + $0x68] sm:$0xff]
    %v36 = vld [vmem:[%s0 + $0x70] sm:$0xff]
    %v37 = vld [vmem:[%s0 + $0x78] sm:$0xff]
    %v38 = vld [vmem:[%s0 + $0x80] sm:$0xff]
    %v39 = vld [vmem:[%s0 + $0x88] sm:$0xff]
    %v40 = vld [vmem:[%s0 + $0x90] sm:$0xff]
    %v41 = vld [vmem:[%s0 + $0x98] sm:$0xff]
    %v42 = vld [vmem:[%s0 + $0xa0] sm:$0xff]
    %v43 = vld [vmem:[%s0 + $0xa8] sm:$0xff]
    %v44 = vld [vmem:[%s0 + $0xb0] sm:$0xff]
    %v45 = vld [vmem:[%s0 + $0xb8] sm:$0xff]
    %v46 = vld [vmem:[%s0 + $0xc0] sm:$0xff]
    %v47 = vld [vmem:[%s0 + $0xc8] sm:$0xff]
    %v48 = vld [vmem:[%s0 + $0xd0] sm:$0xff]
    %v49 = vld [vmem:[%s0 + $0xd8] sm:$0xff]
    %v50 = vld [vmem:[%s0 + $0xe0] sm:$0xff]
    %v51 = vld [vmem:[%s0 + $0xe8] sm:$0xff]
    %v52 = vld [vmem:[%s0 + $0xf0] sm:$0xff]
    %v53 = vld [vmem:[%s0 + $0xf8] sm:$0xff]
    %v54 = vpack.c.bf16 %v23, %v22
    %v55 = vpack.c.bf16 %v25, %v24
    %v56 = vpack.c.bf16 %v27, %v26
    %v57 = vpack.c.bf16 %v29, %v28
    %v58 = vpack.c.bf16 %v31, %v30
    %v59 = vpack.c.bf16 %v33, %v32
    %v60 = vpack.c.bf16 %v35, %v34
    %v61 = vpack.c.bf16 %v37, %v36
    %v62 = vpack.c.bf16 %v39, %v38
    %v63 = vpack.c.bf16 %v41, %v40
    %v64 = vpack.c.bf16 %v43, %v42
    %v65 = vpack.c.bf16 %v45, %v44
    %v66 = vpack.c.bf16 %v47, %v46
    %v67 = vpack.c.bf16 %v49, %v48
    %v68 = vpack.c.bf16 %v51, %v50
    %v69 = vpack.c.bf16 %v53, %v52
    %v70 = vld [vmem:[%s1] sm:$0xf]
    %v71 = vld [vmem:[%s1 + $0x4] sm:$0xf]
    %v72 = vld [vmem:[%s2] sm:$0x1]
    %v74 = vlaneseq
    %v75 = vshrl.u32 %v74, 7
    %v76 = vsub.s32 0, %v75
    %v77 = vrot.slane %v72, %v76
    %v81 = vunpack.c.l.b16 %v70
    %v82 = vunpack.c.l.b16 %v71
    %v83 = vpack.c.b16 %v82, %v81
    %vm85 = vcmask 130048
    %v87 = vsel %vm85, %v54, 0
    %v90 = vsel %vm85, %v55, 0
    %v93 = vsel %vm85, %v56, 0
    %v96 = vsel %vm85, %v57, 0
    %v99 = vsel %vm85, %v58, 0
    %v102 = vsel %vm85, %v59, 0
    %v105 = vsel %vm85, %v60, 0
    %v108 = vsel %vm85, %v61, 0
    %v111 = vsel %vm85, %v62, 0
    %v114 = vsel %vm85, %v63, 0
    %v117 = vsel %vm85, %v64, 0
    %v120 = vsel %vm85, %v65, 0
    %v123 = vsel %vm85, %v66, 0
    %v126 = vsel %vm85, %v67, 0
    %v129 = vsel %vm85, %v68, 0
    %v132 = vsel %vm85, %v69, 0
    %134 = vmatprep.subr.bf16.mxu0 0
    %135 = vmatpush1.bf16.msra.mxu0 0
    %136 = vmatprep.subr.bf16.mxu0 0
    %137 = vmatpush1.bf16.msra.mxu0 0
    %138 = vmatprep.subr.bf16.mxu0 0
    %139 = vmatpush1.bf16.msra.mxu0 0
    %140 = vmatprep.subr.bf16.mxu0 0
    %141 = vmatpush1.bf16.msra.mxu0 0
    %142 = vmatprep.subr.bf16.mxu0 0
    %143 = vmatpush1.bf16.msra.mxu0 0
    %144 = vmatprep.subr.bf16.mxu0 0
    %145 = vmatpush1.bf16.msra.mxu0 0
    %146 = vmatprep.subr.bf16.mxu0 0
    %147 = vmatpush1.bf16.msra.mxu0 0
    %148 = vmatprep.subr.bf16.mxu0 0
    %149 = vmatpush1.bf16.msra.mxu0 %v83
    %150 = vmatprep.subr.bf16.mxu0 0
    %151 = vmatpush2.bf16.msra.mxu0 0
    %152 = vmatprep.subr.bf16.mxu0 0
    %153 = vmatpush2.bf16.msra.mxu0 0
    %154 = vmatprep.subr.bf16.mxu0 0
    %155 = vmatpush2.bf16.msra.mxu0 0
    %156 = vmatprep.subr.bf16.mxu0 0
    %157 = vmatpush2.bf16.msra.mxu0 0
    %158 = vmatprep.subr.bf16.mxu0 0
    %159 = vmatpush2.bf16.msra.mxu0 0
    %160 = vmatprep.subr.bf16.mxu0 0
    %161 = vmatpush2.bf16.msra.mxu0 0
    %162 = vmatprep.subr.bf16.mxu0 0
    %163 = vmatpush2.bf16.msra.mxu0 0
    %164 = vmatprep.subr.bf16.mxu0 0
    %165 = vmatpush2.bf16.msra.mxu0 0
    %166 = vmatprep.mubr.bf16.mxu0 0
    %167 = vmatmul.mubr.bf16.gmra.mxu0 %v87
    %v168 = vpop.f32.mrf.mxu0
    %v169 = vadd.f32 %v77, %v168
    %v170 = vpop.f32.mrf.mxu0
    %v171 = vpop.f32.mrf.mxu0
    %v172 = vadd.f32 %v77, %v171
    %v173 = vpop.f32.mrf.mxu0
    %174 = vmatprep.mubr.bf16.mxu0 0
    %175 = vmatmul.mubr.bf16.gmra.mxu0 %v90
    %v176 = vpop.f32.mrf.mxu0
    %v177 = vadd.f32 %v77, %v176
    %v178 = vpop.f32.mrf.mxu0
    %v179 = vpop.f32.mrf.mxu0
    %v180 = vadd.f32 %v77, %v179
    %v181 = vpop.f32.mrf.mxu0
    %182 = vmatprep.mubr.bf16.mxu0 0
    %183 = vmatmul.mubr.bf16.gmra.mxu0 %v93
    %v184 = vpop.f32.mrf.mxu0
    %v185 = vadd.f32 %v77, %v184
    %v186 = vpop.f32.mrf.mxu0
    %v187 = vpop.f32.mrf.mxu0
    %v188 = vadd.f32 %v77, %v187
    %v189 = vpop.f32.mrf.mxu0
    %190 = vmatprep.mubr.bf16.mxu0 0
    %191 = vmatmul.mubr.bf16.gmra.mxu0 %v96
    %v192 = vpop.f32.mrf.mxu0
    %v193 = vadd.f32 %v77, %v192
    %v194 = vpop.f32.mrf.mxu0
    %v195 = vpop.f32.mrf.mxu0
    %v196 = vadd.f32 %v77, %v195
    %v197 = vpop.f32.mrf.mxu0
    %198 = vmatprep.mubr.bf16.mxu0 0
    %199 = vmatmul.mubr.bf16.gmra.mxu0 %v99
    %v200 = vpop.f32.mrf.mxu0
    %v201 = vadd.f32 %v77, %v200
    %v202 = vpop.f32.mrf.mxu0
    %v203 = vpop.f32.mrf.mxu0
    %v204 = vadd.f32 %v77, %v203
    %v205 = vpop.f32.mrf.mxu0
    %206 = vmatprep.mubr.bf16.mxu0 0
    %207 = vmatmul.mubr.bf16.gmra.mxu0 %v102
    %v208 = vpop.f32.mrf.mxu0
    %v209 = vadd.f32 %v77, %v208
    %v210 = vpop.f32.mrf.mxu0
    %v211 = vpop.f32.mrf.mxu0
    %v212 = vadd.f32 %v77, %v211
    %v213 = vpop.f32.mrf.mxu0
    %214 = vmatprep.mubr.bf16.mxu0 0
    %215 = vmatmul.mubr.bf16.gmra.mxu0 %v105
    %v216 = vpop.f32.mrf.mxu0
    %v217 = vadd.f32 %v77, %v216
    %v218 = vpop.f32.mrf.mxu0
    %v219 = vpop.f32.mrf.mxu0
    %v220 = vadd.f32 %v77, %v219
    %v221 = vpop.f32.mrf.mxu0
    %222 = vmatprep.mubr.bf16.mxu0 0
    %223 = vmatmul.mubr.bf16.gmra.mxu0 %v108
    %v224 = vpop.f32.mrf.mxu0
    %v225 = vadd.f32 %v77, %v224
    %v226 = vpop.f32.mrf.mxu0
    %v227 = vpop.f32.mrf.mxu0
    %v228 = vadd.f32 %v77, %v227
    %v229 = vpop.f32.mrf.mxu0
    %230 = vmatprep.mubr.bf16.mxu0 0
    %231 = vmatmul.mubr.bf16.gmra.mxu0 %v111
    %v232 = vpop.f32.mrf.mxu0
    %v233 = vadd.f32 %v77, %v232
    %v234 = vpop.f32.mrf.mxu0
    %v235 = vpop.f32.mrf.mxu0
    %v236 = vadd.f32 %v77, %v235
    %v237 = vpop.f32.mrf.mxu0
    %238 = vmatprep.mubr.bf16.mxu0 0
    %239 = vmatmul.mubr.bf16.gmra.mxu0 %v114
    %v240 = vpop.f32.mrf.mxu0
    %v241 = vadd.f32 %v77, %v240
    %v242 = vpop.f32.mrf.mxu0
    %v243 = vpop.f32.mrf.mxu0
    %v244 = vadd.f32 %v77, %v243
    %v245 = vpop.f32.mrf.mxu0
    %246 = vmatprep.mubr.bf16.mxu0 0
    %247 = vmatmul.mubr.bf16.gmra.mxu0 %v117
    %v248 = vpop.f32.mrf.mxu0
    %v249 = vadd.f32 %v77, %v248
    %v250 = vpop.f32.mrf.mxu0
    %v251 = vpop.f32.mrf.mxu0
    %v252 = vadd.f32 %v77, %v251
    %v253 = vpop.f32.mrf.mxu0
    %254 = vmatprep.mubr.bf16.mxu0 0
    %255 = vmatmul.mubr.bf16.gmra.mxu0 %v120
    %v256 = vpop.f32.mrf.mxu0
    %v257 = vadd.f32 %v77, %v256
    %v258 = vpop.f32.mrf.mxu0
    %v259 = vpop.f32.mrf.mxu0
    %v260 = vadd.f32 %v77, %v259
    %v261 = vpop.f32.mrf.mxu0
    %262 = vmatprep.mubr.bf16.mxu0 0
    %263 = vmatmul.mubr.bf16.gmra.mxu0 %v123
    %v264 = vpop.f32.mrf.mxu0
    %v265 = vadd.f32 %v77, %v264
    %v266 = vpop.f32.mrf.mxu0
    %v267 = vpop.f32.mrf.mxu0
    %v268 = vadd.f32 %v77, %v267
    %v269 = vpop.f32.mrf.mxu0
    %270 = vmatprep.mubr.bf16.mxu0 0
    %271 = vmatmul.mubr.bf16.gmra.mxu0 %v126
    %v272 = vpop.f32.mrf.mxu0
    %v273 = vadd.f32 %v77, %v272
    %v274 = vpop.f32.mrf.mxu0
    %v275 = vpop.f32.mrf.mxu0
    %v276 = vadd.f32 %v77, %v275
    %v277 = vpop.f32.mrf.mxu0
    %278 = vmatprep.mubr.bf16.mxu0 0
    %279 = vmatmul.mubr.bf16.gmra.mxu0 %v129
    %v280 = vpop.f32.mrf.mxu0
    %v281 = vadd.f32 %v77, %v280
    %v282 = vpop.f32.mrf.mxu0
    %v283 = vpop.f32.mrf.mxu0
    %v284 = vadd.f32 %v77, %v283
    %v285 = vpop.f32.mrf.mxu0
    %286 = vmatprep.mubr.bf16.mxu0 0
    %287 = vmatmul.mubr.bf16.gmra.mxu0 %v132
    %v288 = vpop.f32.mrf.mxu0
    %v289 = vadd.f32 %v77, %v288
    %v290 = vpop.f32.mrf.mxu0
    %v291 = vpop.f32.mrf.mxu0
    %v292 = vadd.f32 %v77, %v291
    %v293 = vpop.f32.mrf.mxu0
    %294 = vdwg.mxu0
    %v295 = vmax.f32 %v169, 0.0
    %v296 = vmax.f32 %v172, 0.0
    %v297 = vmax.f32 %v177, 0.0
    %v298 = vmax.f32 %v180, 0.0
    %v299 = vmax.f32 %v185, 0.0
    %v300 = vmax.f32 %v188, 0.0
    %v301 = vmax.f32 %v193, 0.0
    %v302 = vmax.f32 %v196, 0.0
    %v303 = vmax.f32 %v201, 0.0
    %v304 = vmax.f32 %v204, 0.0
    %v305 = vmax.f32 %v209, 0.0
    %v306 = vmax.f32 %v212, 0.0
    %v307 = vmax.f32 %v217, 0.0
    %v308 = vmax.f32 %v220, 0.0
    %v309 = vmax.f32 %v225, 0.0
    %v310 = vmax.f32 %v228, 0.0
    %v311 = vmax.f32 %v233, 0.0
    %v312 = vmax.f32 %v236, 0.0
    %v313 = vmax.f32 %v241, 0.0
    %v314 = vmax.f32 %v244, 0.0
    %v315 = vmax.f32 %v249, 0.0
    %v316 = vmax.f32 %v252, 0.0
    %v317 = vmax.f32 %v257, 0.0
    %v318 = vmax.f32 %v260, 0.0
    %v319 = vmax.f32 %v265, 0.0
    %v320 = vmax.f32 %v268, 0.0
    %v321 = vmax.f32 %v273, 0.0
    %v322 = vmax.f32 %v276, 0.0
    %v323 = vmax.f32 %v281, 0.0
    %v324 = vmax.f32 %v284, 0.0
    %v325 = vmax.f32 %v289, 0.0
    %v326 = vmax.f32 %v292, 0.0
    %v327 = vpack.c.bf16 %v296, %v295
    %v328 = vpack.c.bf16 %v298, %v297
    %v329 = vpack.c.bf16 %v300, %v299
    %v330 = vpack.c.bf16 %v302, %v301
    %v331 = vpack.c.bf16 %v304, %v303
    %v332 = vpack.c.bf16 %v306, %v305
    %v333 = vpack.c.bf16 %v308, %v307
    %v334 = vpack.c.bf16 %v310, %v309
    %v335 = vpack.c.bf16 %v312, %v311
    %v336 = vpack.c.bf16 %v314, %v313
    %v337 = vpack.c.bf16 %v316, %v315
    %v338 = vpack.c.bf16 %v318, %v317
    %v339 = vpack.c.bf16 %v320, %v319
    %v340 = vpack.c.bf16 %v322, %v321
    %v341 = vpack.c.bf16 %v324, %v323
    %v342 = vpack.c.bf16 %v326, %v325
    %v343 = vld [vmem:[%s3] sm:$0xf]
    %v344 = vld [vmem:[%s3 + $0x4] sm:$0xf]
    %v345 = vld [vmem:[%s3 + $0x8] sm:$0xf]
    %v346 = vld [vmem:[%s3 + $0xc] sm:$0xf]
    %v347 = vld [vmem:[%s3 + $0x10] sm:$0xf]
    %v348 = vld [vmem:[%s3 + $0x14] sm:$0xf]
    %v349 = vld [vmem:[%s3 + $0x18] sm:$0xf]
    %v350 = vld [vmem:[%s3 + $0x1c] sm:$0xf]
    %v351 = vld [vmem:[%s3 + $0x20] sm:$0xf]
    %v352 = vld [vmem:[%s3 + $0x24] sm:$0xf]
    %v353 = vld [vmem:[%s3 + $0x28] sm:$0xf]
    %v354 = vld [vmem:[%s3 + $0x2c] sm:$0xf]
    %v355 = vld [vmem:[%s3 + $0x30] sm:$0xf]
    %v356 = vld [vmem:[%s3 + $0x34] sm:$0xf]
    %v357 = vld [vmem:[%s3 + $0x38] sm:$0xf]
    %v358 = vld [vmem:[%s3 + $0x3c] sm:$0xf]
    %v359 = vld [vmem:[%s4] sm:$0x1]
    %v361 = vlaneseq
    %v362 = vshrl.u32 %v361, 7
    %v363 = vsub.s32 0, %v362
    %v364 = vrot.slane %v359, %v363
    %v382 = vunpack.c.l.b16 %v343
    %v383 = vunpack.c.l.b16 %v344
    %v384 = vunpack.c.l.b16 %v345
    %v385 = vunpack.c.l.b16 %v346
    %v386 = vunpack.c.l.b16 %v347
    %v387 = vunpack.c.l.b16 %v348
    %v388 = vunpack.c.l.b16 %v349
    %v389 = vunpack.c.l.b16 %v350
    %v390 = vunpack.c.l.b16 %v351
    %v391 = vunpack.c.l.b16 %v352
    %v392 = vunpack.c.l.b16 %v353
    %v393 = vunpack.c.l.b16 %v354
    %v394 = vunpack.c.l.b16 %v355
    %v395 = vunpack.c.l.b16 %v356
    %v396 = vunpack.c.l.b16 %v357
    %v397 = vunpack.c.l.b16 %v358
    %v398 = vpack.c.b16 %v383, %v382
    %v399 = vpack.c.b16 %v385, %v384
    %v400 = vpack.c.b16 %v387, %v386
    %v401 = vpack.c.b16 %v389, %v388
    %v402 = vpack.c.b16 %v391, %v390
    %v403 = vpack.c.b16 %v393, %v392
    %v404 = vpack.c.b16 %v395, %v394
    %v405 = vpack.c.b16 %v397, %v396
    %414 = vmatprep.subr.bf16.mxu0 0
    %415 = vmatpush1.bf16.msra.mxu0 %v405
    %416 = vmatprep.subr.bf16.mxu0 0
    %417 = vmatpush1.bf16.msra.mxu0 %v404
    %418 = vmatprep.subr.bf16.mxu0 0
    %419 = vmatpush1.bf16.msra.mxu0 %v403
    %420 = vmatprep.subr.bf16.mxu0 0
    %421 = vmatpush1.bf16.msra.mxu0 %v402
    %422 = vmatprep.subr.bf16.mxu0 0
    %423 = vmatpush1.bf16.msra.mxu0 %v401
    %424 = vmatprep.subr.bf16.mxu0 0
    %425 = vmatpush1.bf16.msra.mxu0 %v400
    %426 = vmatprep.subr.bf16.mxu0 0
    %427 = vmatpush1.bf16.msra.mxu0 %v399
    %428 = vmatprep.subr.bf16.mxu0 0
    %429 = vmatpush1.bf16.msra.mxu0 %v398
    %430 = vmatprep.subr.bf16.mxu0 0
    %431 = vmatpush2.bf16.msra.mxu0 0
    %432 = vmatprep.subr.bf16.mxu0 0
    %433 = vmatpush2.bf16.msra.mxu0 0
    %434 = vmatprep.subr.bf16.mxu0 0
    %435 = vmatpush2.bf16.msra.mxu0 0
    %436 = vmatprep.subr.bf16.mxu0 0
    %437 = vmatpush2.bf16.msra.mxu0 0
    %438 = vmatprep.subr.bf16.mxu0 0
    %439 = vmatpush2.bf16.msra.mxu0 0
    %440 = vmatprep.subr.bf16.mxu0 0
    %441 = vmatpush2.bf16.msra.mxu0 0
    %442 = vmatprep.subr.bf16.mxu0 0
    %443 = vmatpush2.bf16.msra.mxu0 0
    %444 = vmatprep.subr.bf16.mxu0 0
    %445 = vmatpush2.bf16.msra.mxu0 0
    %446 = vmatprep.mubr.bf16.mxu0 0
    %447 = vmatmul.mubr.bf16.gmra.mxu0 %v327
    %v448 = vpop.f32.mrf.mxu0
    %v449 = vadd.f32 %v364, %v448
    %v450 = vpop.f32.mrf.mxu0
    %v451 = vpop.f32.mrf.mxu0
    %v452 = vadd.f32 %v364, %v451
    %v453 = vpop.f32.mrf.mxu0
    %454 = vmatprep.mubr.bf16.mxu0 0
    %455 = vmatmul.mubr.bf16.gmra.mxu0 %v328
    %v456 = vpop.f32.mrf.mxu0
    %v457 = vadd.f32 %v364, %v456
    %v458 = vpop.f32.mrf.mxu0
    %v459 = vpop.f32.mrf.mxu0
    %v460 = vadd.f32 %v364, %v459
    %v461 = vpop.f32.mrf.mxu0
    %462 = vmatprep.mubr.bf16.mxu0 0
    %463 = vmatmul.mubr.bf16.gmra.mxu0 %v329
    %v464 = vpop.f32.mrf.mxu0
    %v465 = vadd.f32 %v364, %v464
    %v466 = vpop.f32.mrf.mxu0
    %v467 = vpop.f32.mrf.mxu0
    %v468 = vadd.f32 %v364, %v467
    %v469 = vpop.f32.mrf.mxu0
    %470 = vmatprep.mubr.bf16.mxu0 0
    %471 = vmatmul.mubr.bf16.gmra.mxu0 %v330
    %v472 = vpop.f32.mrf.mxu0
    %v473 = vadd.f32 %v364, %v472
    %v474 = vpop.f32.mrf.mxu0
    %v475 = vpop.f32.mrf.mxu0
    %v476 = vadd.f32 %v364, %v475
    %v477 = vpop.f32.mrf.mxu0
    %478 = vmatprep.mubr.bf16.mxu0 0
    %479 = vmatmul.mubr.bf16.gmra.mxu0 %v331
    %v480 = vpop.f32.mrf.mxu0
    %v481 = vadd.f32 %v364, %v480
    %v482 = vpop.f32.mrf.mxu0
    %v483 = vpop.f32.mrf.mxu0
    %v484 = vadd.f32 %v364, %v483
    %v485 = vpop.f32.mrf.mxu0
    %486 = vmatprep.mubr.bf16.mxu0 0
    %487 = vmatmul.mubr.bf16.gmra.mxu0 %v332
    %v488 = vpop.f32.mrf.mxu0
    %v489 = vadd.f32 %v364, %v488
    %v490 = vpop.f32.mrf.mxu0
    %v491 = vpop.f32.mrf.mxu0
    %v492 = vadd.f32 %v364, %v491
    %v493 = vpop.f32.mrf.mxu0
    %494 = vmatprep.mubr.bf16.mxu0 0
    %495 = vmatmul.mubr.bf16.gmra.mxu0 %v333
    %v496 = vpop.f32.mrf.mxu0
    %v497 = vadd.f32 %v364, %v496
    %v498 = vpop.f32.mrf.mxu0
    %v499 = vpop.f32.mrf.mxu0
    %v500 = vadd.f32 %v364, %v499
    %v501 = vpop.f32.mrf.mxu0
    %502 = vmatprep.mubr.bf16.mxu0 0
    %503 = vmatmul.mubr.bf16.gmra.mxu0 %v334
    %v504 = vpop.f32.mrf.mxu0
    %v505 = vadd.f32 %v364, %v504
    %v506 = vpop.f32.mrf.mxu0
    %v507 = vpop.f32.mrf.mxu0
    %v508 = vadd.f32 %v364, %v507
    %v509 = vpop.f32.mrf.mxu0
    %510 = vmatprep.mubr.bf16.mxu0 0
    %511 = vmatmul.mubr.bf16.gmra.mxu0 %v335
    %v512 = vpop.f32.mrf.mxu0
    %v513 = vadd.f32 %v364, %v512
    %v514 = vpop.f32.mrf.mxu0
    %v515 = vpop.f32.mrf.mxu0
    %v516 = vadd.f32 %v364, %v515
    %v517 = vpop.f32.mrf.mxu0
    %518 = vmatprep.mubr.bf16.mxu0 0
    %519 = vmatmul.mubr.bf16.gmra.mxu0 %v336
    %v520 = vpop.f32.mrf.mxu0
    %v521 = vadd.f32 %v364, %v520
    %v522 = vpop.f32.mrf.mxu0
    %v523 = vpop.f32.mrf.mxu0
    %v524 = vadd.f32 %v364, %v523
    %v525 = vpop.f32.mrf.mxu0
    %526 = vmatprep.mubr.bf16.mxu0 0
    %527 = vmatmul.mubr.bf16.gmra.mxu0 %v337
    %v528 = vpop.f32.mrf.mxu0
    %v529 = vadd.f32 %v364, %v528
    %v530 = vpop.f32.mrf.mxu0
    %v531 = vpop.f32.mrf.mxu0
    %v532 = vadd.f32 %v364, %v531
    %v533 = vpop.f32.mrf.mxu0
    %534 = vmatprep.mubr.bf16.mxu0 0
    %535 = vmatmul.mubr.bf16.gmra.mxu0 %v338
    %v536 = vpop.f32.mrf.mxu0
    %v537 = vadd.f32 %v364, %v536
    %v538 = vpop.f32.mrf.mxu0
    %v539 = vpop.f32.mrf.mxu0
    %v540 = vadd.f32 %v364, %v539
    %v541 = vpop.f32.mrf.mxu0
    %542 = vmatprep.mubr.bf16.mxu0 0
    %543 = vmatmul.mubr.bf16.gmra.mxu0 %v339
    %v544 = vpop.f32.mrf.mxu0
    %v545 = vadd.f32 %v364, %v544
    %v546 = vpop.f32.mrf.mxu0
    %v547 = vpop.f32.mrf.mxu0
    %v548 = vadd.f32 %v364, %v547
    %v549 = vpop.f32.mrf.mxu0
    %550 = vmatprep.mubr.bf16.mxu0 0
    %551 = vmatmul.mubr.bf16.gmra.mxu0 %v340
    %v552 = vpop.f32.mrf.mxu0
    %v553 = vadd.f32 %v364, %v552
    %v554 = vpop.f32.mrf.mxu0
    %v555 = vpop.f32.mrf.mxu0
    %v556 = vadd.f32 %v364, %v555
    %v557 = vpop.f32.mrf.mxu0
    %558 = vmatprep.mubr.bf16.mxu0 0
    %559 = vmatmul.mubr.bf16.gmra.mxu0 %v341
    %v560 = vpop.f32.mrf.mxu0
    %v561 = vadd.f32 %v364, %v560
    %v562 = vpop.f32.mrf.mxu0
    %v563 = vpop.f32.mrf.mxu0
    %v564 = vadd.f32 %v364, %v563
    %v565 = vpop.f32.mrf.mxu0
    %566 = vmatprep.mubr.bf16.mxu0 0
    %567 = vmatmul.mubr.bf16.gmra.mxu0 %v342
    %v568 = vpop.f32.mrf.mxu0
    %v569 = vadd.f32 %v364, %v568
    %v570 = vpop.f32.mrf.mxu0
    %v571 = vpop.f32.mrf.mxu0
    %v572 = vadd.f32 %v364, %v571
    %v573 = vpop.f32.mrf.mxu0
    %574 = vdwg.mxu0
    %575 = vst [vmem:[#allocation2] sm:$0xff] %v449
    %576 = vst [vmem:[#allocation2 + $0x8] sm:$0xff] %v452
    %577 = vst [vmem:[#allocation2 + $0x10] sm:$0xff] %v457
    %578 = vst [vmem:[#allocation2 + $0x18] sm:$0xff] %v460
    %579 = vst [vmem:[#allocation2 + $0x20] sm:$0xff] %v465
    %580 = vst [vmem:[#allocation2 + $0x28] sm:$0xff] %v468
    %581 = vst [vmem:[#allocation2 + $0x30] sm:$0xff] %v473
    %582 = vst [vmem:[#allocation2 + $0x38] sm:$0xff] %v476
    %583 = vst [vmem:[#allocation2 + $0x40] sm:$0xff] %v481
    %584 = vst [vmem:[#allocation2 + $0x48] sm:$0xff] %v484
    %585 = vst [vmem:[#allocation2 + $0x50] sm:$0xff] %v489
    %586 = vst [vmem:[#allocation2 + $0x58] sm:$0xff] %v492
    %587 = vst [vmem:[#allocation2 + $0x60] sm:$0xff] %v497
    %588 = vst [vmem:[#allocation2 + $0x68] sm:$0xff] %v500
    %589 = vst [vmem:[#allocation2 + $0x70] sm:$0xff] %v505
    %590 = vst [vmem:[#allocation2 + $0x78] sm:$0xff] %v508
    %591 = vst [vmem:[#allocation2 + $0x80] sm:$0xff] %v513
    %592 = vst [vmem:[#allocation2 + $0x88] sm:$0xff] %v516
    %593 = vst [vmem:[#allocation2 + $0x90] sm:$0xff] %v521
    %594 = vst [vmem:[#allocation2 + $0x98] sm:$0xff] %v524
    %595 = vst [vmem:[#allocation2 + $0xa0] sm:$0xff] %v529
    %596 = vst [vmem:[#allocation2 + $0xa8] sm:$0xff] %v532
    %597 = vst [vmem:[#allocation2 + $0xb0] sm:$0xff] %v537
    %598 = vst [vmem:[#allocation2 + $0xb8] sm:$0xff] %v540
    %599 = vst [vmem:[#allocation2 + $0xc0] sm:$0xff] %v545
    %600 = vst [vmem:[#allocation2 + $0xc8] sm:$0xff] %v548
    %601 = vst [vmem:[#allocation2 + $0xd0] sm:$0xff] %v553
    %602 = vst [vmem:[#allocation2 + $0xd8] sm:$0xff] %v556
    %603 = vst [vmem:[#allocation2 + $0xe0] sm:$0xff] %v561
    %604 = vst [vmem:[#allocation2 + $0xe8] sm:$0xff] %v564
    %605 = vst [vmem:[#allocation2 + $0xf0] sm:$0xff] %v569
    %606 = vst [vmem:[#allocation2 + $0xf8] sm:$0xff] %v572
    // Predicated region
    $region22: #{tpu_custom_call.1} parent=1 // pred_check
      _
    $region23: #{tpu_custom_call.1} parent=1 // pred_check_branch
      %608 = sbr.rel (0) target = $region25
    $region24: #{tpu_custom_call.1} parent=1 // pred_region
      %s610 = ssub.s32 4096, 4096
      %611 = vsyncadd [#allocation3], %s610
      %s612 = sshll.u32 [#allocation2], 4
      %s613 = int_to_ptr.vmem [resolvable:$true] %s612
      %618 = dma.vmem_to_hbm [thread:$0]  %s613, 4096, %s5, [#allocation3], 128, 128, 8
    $region25: #{tpu_custom_call.1} parent=1 // pred_fallthru
      _
    // Predicated region
    $region26: #{tpu_custom_call.1} parent=1 // pred_check
      _
    $region27: #{tpu_custom_call.1} parent=1 // pred_check_branch
      %620 = sbr.rel (0) target = $region29
    $region28: #{tpu_custom_call.1} parent=1 // pred_region
      %621 = dma.done [#allocation3], 4096
    $region29: #{tpu_custom_call.1} parent=1 // pred_fallthru
      _
    %622 = vsyncpa [#allocation3], 1

</llo_original>
